<compile_context>
chip_gen: v7x
topology: tpu7x:2x2x1
jax: 0.10.0
libtpu: 0.0.40
codegen_flags: <defaults>
</compile_context>

<pallas_src>
import jax
import jax.numpy as jnp
from jax.experimental import pallas as pl
from jax.experimental.pallas import tpu as pltpu


def _round_up(x, m):
    return (x + m - 1) // m * m


def _probe_kernel(x_ref, w1_ref, b1_ref, w2_ref, b2_ref, o_ref):
    # relu on the raw embedding, then cast to the MXU operand dtype (bf16/f32)
    x = jnp.maximum(x_ref[...], 0).astype(w1_ref.dtype)
    # fc1: (TB, 250) @ (250, 50) + (1, 50), f32 accumulation + f32 bias
    h = jnp.dot(x, w1_ref[...], preferred_element_type=jnp.float32) + b1_ref[...]
    # dropout(training=False) is identity; then relu, cast for second MXU pass
    h = jnp.maximum(h, 0.0).astype(w2_ref.dtype)
    # fc2: (TB, 50) @ (50, C8) + (1, C8)
    out = jnp.dot(h, w2_ref[...], preferred_element_type=jnp.float32) + b2_ref[...]
    o_ref[...] = out.astype(o_ref.dtype)


def convnet_linear_probe_early(embed, w1_t, b1, w2_t, b2, *, tb=4096,
                               mxu_bf16=True):
    """embed: (B, 250); w1_t: (250, 50); b1: (50,); w2_t: (50, C); b2: (C,).

    Weights are passed pre-transposed (in_features, out_features).
    Returns (B, C) float32 logits.  mxu_bf16=True feeds the MXU bf16 operands
    (f32 accumulation); mxu_bf16=False keeps exact f32 operands.
    """
    B, IN = embed.shape
    HID = w1_t.shape[1]
    C = w2_t.shape[1]
    C8 = _round_up(C, 8)          # tiny output padding (exact: zero cols/bias)

    # Batch tile: multiple of 8, amortizes grid-step overhead, and capped at
    # ceil(B/2) so the grid has >=2 steps (lets v7x shard across both TCs).
    tb = _round_up(max(tb, 8), 8)
    TB = min(tb, _round_up(B, 8))
    if B > 8:
        TB = min(TB, max(8, _round_up(pl.cdiv(B, 2), 8)))
    grid = (pl.cdiv(B, TB),)      # last block overhangs; OOB rows are discarded

    comp_dtype = jnp.bfloat16 if mxu_bf16 else jnp.float32
    w1p = w1_t.astype(comp_dtype)                                   # (250, 50)
    w2p = jnp.pad(w2_t, ((0, 0), (0, C8 - C))).astype(comp_dtype)   # (50, C8)
    b1p = b1.astype(jnp.float32).reshape(1, HID)                    # (1, 50)
    b2p = jnp.pad(b2.astype(jnp.float32), (0, C8 - C)).reshape(1, C8)

    x_bytes = jnp.dtype(embed.dtype).itemsize
    w_bytes = jnp.dtype(comp_dtype).itemsize

    # Advisory cost hint (post-shrink traffic): dominated by the embed read.
    cost = pl.CostEstimate(
        flops=2 * B * (IN * HID + HID * C8),
        transcendentals=0,
        bytes_accessed=(B * IN * x_bytes + B * C8 * 4
                        + (IN * HID + HID * C8) * w_bytes + (HID + C8) * 4),
    )

    # Scoped-VMEM budget: double-buffered embed/out tiles + in-kernel temps +
    # resident weights, with headroom.  >=32 MiB (safe on all of v5e/v6e/v7x),
    # capped below v7x's 64 MiB physical VMEM.
    vmem_est = (2 * TB * IN * x_bytes            # embed tiles (double-buffered)
                + 2 * TB * C8 * 4                # output tiles (double-buffered)
                + TB * IN * (4 + w_bytes)        # relu temp + cast temp
                + TB * HID * (4 + w_bytes)       # fc1 activation temps
                + 4 * (IN * HID + HID * C8) * w_bytes
                + (2 << 20))
    vmem_limit = int(min(max(vmem_est, 32 << 20), 60 << 20))

    out = pl.pallas_call(
        _probe_kernel,
        out_shape=jax.ShapeDtypeStruct((B, C8), jnp.float32),
        grid=grid,
        in_specs=[
            pl.BlockSpec((TB, IN), lambda i: (i, 0)),    # embed, streamed
            pl.BlockSpec((IN, HID), lambda i: (0, 0)),   # w1, VMEM-resident
            pl.BlockSpec((1, HID), lambda i: (0, 0)),    # b1, resident
            pl.BlockSpec((HID, C8), lambda i: (0, 0)),   # w2, resident
            pl.BlockSpec((1, C8), lambda i: (0, 0)),     # b2, resident
        ],
        out_specs=pl.BlockSpec((TB, C8), lambda i: (i, 0)),
        compiler_params=pltpu.CompilerParams(
            dimension_semantics=("parallel",),
            vmem_limit_bytes=vmem_limit,
        ),
        cost_estimate=cost,
    )(embed, w1p, b1p, w2p, b2p)

    return out[:, :C] if C8 != C else out


def _reference(embed, w1_t, b1, w2_t, b2, compute_dtype=jnp.float32):
    x = jnp.maximum(embed, 0.0).astype(compute_dtype)
    h = jnp.dot(x, w1_t.astype(compute_dtype),
                preferred_element_type=jnp.float32) + b1
    h = jnp.maximum(h, 0.0).astype(compute_dtype)
    return jnp.dot(h, w2_t.astype(compute_dtype),
                   preferred_element_type=jnp.float32) + b2


def _make_params(key, num_classes, B, IN=250, HID=50):
    C = 1 if num_classes == 2 else num_classes
    k_x, k_w1, k_b1, k_w2, k_b2 = jax.random.split(key, 5)
    embed = jax.random.normal(k_x, (B, IN), dtype=jnp.float32)
    w1_t = jax.random.uniform(k_w1, (IN, HID), jnp.float32, -1.0, 1.0) / jnp.sqrt(IN)
    b1 = jax.random.uniform(k_b1, (HID,), jnp.float32, -1.0, 1.0) / jnp.sqrt(IN)
    w2_t = jax.random.uniform(k_w2, (HID, C), jnp.float32, -1.0, 1.0) / jnp.sqrt(HID)
    b2 = jax.random.uniform(k_b2, (C,), jnp.float32, -1.0, 1.0) / jnp.sqrt(HID)
    return embed, w1_t, b1, w2_t, b2, C


if __name__ == "__main__":
    key = jax.random.PRNGKey(0)
    k1, k2 = jax.random.split(key)

    # Case 1: num_classes=5, B=300, tb=128 -> 3 grid steps with an overhanging
    # last batch block.  Exact f32-operand mode vs f32 reference.
    embed, w1_t, b1, w2_t, b2, C = _make_params(k1, num_classes=5, B=300)
    out_f32 = convnet_linear_probe_early(embed, w1_t, b1, w2_t, b2,
                                         tb=128, mxu_bf16=False)
    out_f32 = jax.block_until_ready(out_f32)
    ref_f32 = _reference(embed, w1_t, b1, w2_t, b2)
    assert out_f32.shape == (300, C), out_f32.shape
    assert jnp.allclose(out_f32, ref_f32, atol=1e-4, rtol=1e-4), "mismatch (f32, tiled)"

    # Case 1b: default fast path (bf16 MXU operands) vs bf16-operand reference.
    out_bf = convnet_linear_probe_early(embed, w1_t, b1, w2_t, b2, tb=128)
    out_bf = jax.block_until_ready(out_bf)
    ref_bf = _reference(embed, w1_t, b1, w2_t, b2, compute_dtype=jnp.bfloat16)
    assert jnp.allclose(out_bf, ref_bf, atol=1e-2, rtol=1e-2), "mismatch (bf16)"

    # Case 1c: default tb -> TB capped at ceil(B/2) rounded to 8 -> 2 grid steps.
    out_big = convnet_linear_probe_early(embed, w1_t, b1, w2_t, b2, mxu_bf16=False)
    out_big = jax.block_until_ready(out_big)
    assert jnp.allclose(out_big, ref_f32, atol=1e-4, rtol=1e-4), "mismatch (TB cap)"

    # Case 2: num_classes=2 -> single logit (fc2: 50 -> 1), B=8, single-tile grid.
    embed2, w1_t2, b12, w2_t2, b22, C2 = _make_params(k2, num_classes=2, B=8)
    out2 = convnet_linear_probe_early(embed2, w1_t2, b12, w2_t2, b22,
                                      mxu_bf16=False)
    out2 = jax.block_until_ready(out2)
    ref2 = _reference(embed2, w1_t2, b12, w2_t2, b22)
    assert out2.shape == (8, 1), out2.shape
    assert jnp.allclose(out2, ref2, atol=1e-4, rtol=1e-4), "mismatch (C=1)"

    out2_bf = convnet_linear_probe_early(embed2, w1_t2, b12, w2_t2, b22)
    out2_bf = jax.block_until_ready(out2_bf)
    ref2_bf = _reference(embed2, w1_t2, b12, w2_t2, b22,
                         compute_dtype=jnp.bfloat16)
    assert jnp.allclose(out2_bf, ref2_bf, atol=1e-2, rtol=1e-2), "mismatch (C=1 bf16)"

    print("KERNEL_OK")
</pallas_src>

<mosaic_0001>
module attributes {stable_mosaic.version = 11 : i64} {
  func.func @_probe_kernel(%arg0: i32, %arg1: memref<128x250xf32, #tpu.memory_space<vmem>>, %arg2: memref<250x50xf32, #tpu.memory_space<vmem>>, %arg3: memref<1x50xf32, #tpu.memory_space<vmem>>, %arg4: memref<50x8xf32, #tpu.memory_space<vmem>>, %arg5: memref<1x8xf32, #tpu.memory_space<vmem>>, %arg6: memref<128x8xf32, #tpu.memory_space<vmem>>) attributes {dimension_semantics = [#tpu.dimension_semantics<parallel>], iteration_bounds = array<i64: 3>, scalar_prefetch = 0 : i64, scratch_operands = 0 : i64, tpu.core_type = #tpu.core_type<tc>, window_params = [{transform_indices = @transform_0, window_bounds = array<i64: 128, 250>}, {pipeline_mode = #tpu.pipeline_mode<synchronous>, transform_indices = @transform_1, window_bounds = array<i64: 250, 50>}, {pipeline_mode = #tpu.pipeline_mode<synchronous>, transform_indices = @transform_2, window_bounds = array<i64: 1, 50>}, {pipeline_mode = #tpu.pipeline_mode<synchronous>, transform_indices = @transform_3, window_bounds = array<i64: 50, 8>}, {pipeline_mode = #tpu.pipeline_mode<synchronous>, transform_indices = @transform_4, window_bounds = array<i64: 1, 8>}, {transform_indices = @transform_5, window_bounds = array<i64: 128, 8>}]} {
    %c0 = arith.constant 0 : index
    %c0_0 = arith.constant 0 : index
    %0 = vector.load %arg1[%c0, %c0_0] : memref<128x250xf32, #tpu.memory_space<vmem>>, vector<128x250xf32>
    %cst = arith.constant 0.000000e+00 : f32
    %1 = vector.broadcast %cst : f32 to vector<128x250xf32>
    %2 = arith.maximumf %0, %1 : vector<128x250xf32>
    %c0_1 = arith.constant 0 : index
    %c0_2 = arith.constant 0 : index
    %3 = vector.load %arg2[%c0_1, %c0_2] : memref<250x50xf32, #tpu.memory_space<vmem>>, vector<250x50xf32>
    %cst_3 = arith.constant dense<0.000000e+00> : vector<128x50xf32>
    %4 = tpu.matmul %2, %3, %cst_3 {dimension_numbers = #tpu.dot_dimension_numbers<[1], [0], [0], [1], [0, 0, 1, 1], [], []>} : vector<128x250xf32>, vector<250x50xf32>, vector<128x50xf32> -> vector<128x50xf32>
    %c0_4 = arith.constant 0 : index
    %c0_5 = arith.constant 0 : index
    %5 = vector.load %arg3[%c0_4, %c0_5] : memref<1x50xf32, #tpu.memory_space<vmem>>, vector<1x50xf32>
    %6 = vector.broadcast %5 : vector<1x50xf32> to vector<128x50xf32>
    %7 = arith.addf %4, %6 : vector<128x50xf32>
    %cst_6 = arith.constant 0.000000e+00 : f32
    %8 = vector.broadcast %cst_6 : f32 to vector<128x50xf32>
    %9 = arith.maximumf %7, %8 : vector<128x50xf32>
    %c0_7 = arith.constant 0 : index
    %c0_8 = arith.constant 0 : index
    %10 = vector.load %arg4[%c0_7, %c0_8] : memref<50x8xf32, #tpu.memory_space<vmem>>, vector<50x8xf32>
    %cst_9 = arith.constant dense<0.000000e+00> : vector<128x8xf32>
    %11 = tpu.matmul %9, %10, %cst_9 {dimension_numbers = #tpu.dot_dimension_numbers<[1], [0], [0], [1], [0, 0, 1, 1], [], []>} : vector<128x50xf32>, vector<50x8xf32>, vector<128x8xf32> -> vector<128x8xf32>
    %c0_10 = arith.constant 0 : index
    %c0_11 = arith.constant 0 : index
    %12 = vector.load %arg5[%c0_10, %c0_11] : memref<1x8xf32, #tpu.memory_space<vmem>>, vector<1x8xf32>
    %13 = vector.broadcast %12 : vector<1x8xf32> to vector<128x8xf32>
    %14 = arith.addf %11, %13 : vector<128x8xf32>
    %c0_12 = arith.constant 0 : index
    %c0_13 = arith.constant 0 : index
    %15 = vector.load %arg6[%c0_12, %c0_13] : memref<128x8xf32, #tpu.memory_space<vmem>>, vector<128x8xf32>
    tpu.vector_store %arg6[%c0_12, %c0_13], %14 {strides = array<i32>} : memref<128x8xf32, #tpu.memory_space<vmem>>, vector<128x8xf32>,
    return
  }
  func.func @transform_0(%arg0: i32) -> (i32, i32) {
    %c0_i32 = arith.constant 0 : i32
    %c0_i32_0 = arith.constant 0 : i32
    return %arg0, %c0_i32 : i32, i32
  }
  func.func @transform_1(%arg0: i32) -> (i32, i32) {
    %c0_i32 = arith.constant 0 : i32
    %c0_i32_0 = arith.constant 0 : i32
    %c0_i32_1 = arith.constant 0 : i32
    return %c0_i32, %c0_i32_0 : i32, i32
  }
  func.func @transform_2(%arg0: i32) -> (i32, i32) {
    %c0_i32 = arith.constant 0 : i32
    %c0_i32_0 = arith.constant 0 : i32
    %c0_i32_1 = arith.constant 0 : i32
    return %c0_i32, %c0_i32_0 : i32, i32
  }
  func.func @transform_3(%arg0: i32) -> (i32, i32) {
    %c0_i32 = arith.constant 0 : i32
    %c0_i32_0 = arith.constant 0 : i32
    %c0_i32_1 = arith.constant 0 : i32
    return %c0_i32, %c0_i32_0 : i32, i32
  }
  func.func @transform_4(%arg0: i32) -> (i32, i32) {
    %c0_i32 = arith.constant 0 : i32
    %c0_i32_0 = arith.constant 0 : i32
    %c0_i32_1 = arith.constant 0 : i32
    return %c0_i32, %c0_i32_0 : i32, i32
  }
  func.func @transform_5(%arg0: i32) -> (i32, i32) {
    %c0_i32 = arith.constant 0 : i32
    %c0_i32_0 = arith.constant 0 : i32
    return %arg0, %c0_i32 : i32, i32
  }
}

</mosaic_0001>

<llo_original>
// kernel: tpu_custom_call.1
$region0: #{tpu_custom_call.1}
  #allocation0 [shape = 'u32[]', space=smem, size = 0x4, offset = 0x4, fixed_abs, tag = 'smem constant byte address 0x4 - core index']
  #allocation1 [shape = 'u32[144,128]{1,0:T(1,128)}', space=vmem, size = 0x12000, scoped, tag = 'internal scratch']
  %s0 = inlined_call_operand.hbm [shape: f32[300,250], index: 0, kind: input, shape index: {}]
  %s1 = inlined_call_operand.vmem [shape: f32[250,50], index: 1, kind: input, shape index: {}]
  %s2 = inlined_call_operand.vmem [shape: f32[1,50], index: 2, kind: input, shape index: {}]
  %s3 = inlined_call_operand.vmem [shape: f32[50,8], index: 3, kind: input, shape index: {}]
  %s4 = inlined_call_operand.vmem [shape: f32[1,8], index: 4, kind: input, shape index: {}]
  %s5 = inlined_call_operand.vmem [shape: f32[300,8], index: 5, kind: output, shape index: {}]
  %s6 = sld [smem:[#allocation0]]
  $region105: #{tpu_custom_call.1} parent=0
    _
  %s8 = ssub.s32 1, %s6
  %s9 = scalar_select 0, %s8, %s6
  $region1: #{tpu_custom_call.1} parent=0
    #allocation2 [shape = 'u8[262144]{0}', space=vmem, size = 0x40000, scoped, tag = 'input window, operand 0']
    #allocation3 [shape = 's32[2]{0}', space=sflag, size = 0x8, scoped, tag = 'scoped memory for tpu_custom_call.1']
    #allocation4 [shape = 'u8[131072]{0}', space=vmem, size = 0x20000, scoped, tag = 'output window, operand 0']
    %10 = vsyncpa [#allocation3], 0
    %s11 = scalar_lea.sflag [#allocation3], 1
    %12 = vsyncpa %s11, 0
    loop: start=0, step=1, limit=5
    $region2: #{tpu_custom_call.1} parent=1 // loop_pre_header
      _
    $region3: #{tpu_custom_call.1} parent=1 // loop_header
      %s14 = sphi 0, %s18
      %p15 = scmp.ge.s32.totalorder %s14, 5
      %s24 = sphi 0, %s26
      %s27 = sphi 0, %s24
      %s28 = sphi 0, %s27
      %s44 = sphi 0, %s28
      %s48 = sphi 0, %s48
      %s50 = sphi 0, %s48
      %s51 = sphi 0, %s50
      %s65 = sphi 0, %s51
      %s69 = sphi 0, %s69
      %s71 = sphi 0, %s69
      %s72 = sphi 0, %s71
      %s86 = sphi 0, %s72
      %s90 = sphi 0, %s90
      %s92 = sphi 0, %s90
      %s93 = sphi 0, %s92
      %s107 = sphi 0, %s93
      %s111 = sphi 0, %s111
      %s113 = sphi 0, %s111
      %s114 = sphi 0, %s113
      %s128 = sphi 0, %s114
      %s134 = sphi 0, %s136
      %s137 = sphi 0, %s134
      %s138 = sphi 0, %s137
      %s154 = sphi 0, %s138
    $region4: #{tpu_custom_call.1} parent=1 // loop_header_branch
      %17 = sbr.rel (%p15) target = $region8
    $region5: #{tpu_custom_call.1} parent=1 // loop_body
      %s19 = ssub.s32 %s14, 1
      %s20 = ssub.s32 %s14, 2
      %s21 = sadd.s32 %s14, 1
      %s22 = ssub.s32 %s14, %s21
      %p23 = scmp.eq.s32.totalorder %s22, 0
      %s25 = sadd.s32 %s24, 1
      %s26 = scalar_select %p23, %s24, %s25
      %p29 = pneg %p23
      %p30 = scmp.eq.s32.totalorder %s14, 2
      %p31 = por %p29, %p30
      %p32 = scmp.ne.s32.totalorder %s24, %s27
      %p33 = scmp.eq.s32.totalorder %s14, 0
      %p34 = por %p32, %p33
      %p35 = scmp.ne.s32.totalorder %s24, %s27
      %p36 = scmp.eq.s32.totalorder %s19, 2
      %p37 = por %p35, %p36
      %p38 = scmp.ne.s32.totalorder %s27, %s28
      %p39 = scmp.eq.s32.totalorder %s19, 0
      %p40 = por %p38, %p39
      %p41 = scmp.ne.s32.totalorder %s27, %s28
      %p42 = scmp.eq.s32.totalorder %s20, 2
      %p43 = por %p41, %p42
      %p45 = scmp.ne.s32.totalorder %s28, %s44
      %p46 = scmp.eq.s32.totalorder %s20, 0
      %p47 = por %p45, %p46
      %s49 = sadd.s32 %s48, 1
      %p52 = scmp.eq.s32.totalorder %s14, 2
      %p53 = scmp.ne.s32.totalorder %s48, %s50
      %p54 = scmp.eq.s32.totalorder %s14, 0
      %p55 = por %p53, %p54
      %p56 = scmp.ne.s32.totalorder %s48, %s50
      %p57 = scmp.eq.s32.totalorder %s19, 2
      %p58 = por %p56, %p57
      %p59 = scmp.ne.s32.totalorder %s50, %s51
      %p60 = scmp.eq.s32.totalorder %s19, 0
      %p61 = por %p59, %p60
      %p62 = scmp.ne.s32.totalorder %s50, %s51
      %p63 = scmp.eq.s32.totalorder %s20, 2
      %p64 = por %p62, %p63
      %p66 = scmp.ne.s32.totalorder %s51, %s65
      %p67 = scmp.eq.s32.totalorder %s20, 0
      %p68 = por %p66, %p67
      %s70 = sadd.s32 %s69, 1
      %p73 = scmp.eq.s32.totalorder %s14, 2
      %p74 = scmp.ne.s32.totalorder %s69, %s71
      %p75 = scmp.eq.s32.totalorder %s14, 0
      %p76 = por %p74, %p75
      %p77 = scmp.ne.s32.totalorder %s69, %s71
      %p78 = scmp.eq.s32.totalorder %s19, 2
      %p79 = por %p77, %p78
      %p80 = scmp.ne.s32.totalorder %s71, %s72
      %p81 = scmp.eq.s32.totalorder %s19, 0
      %p82 = por %p80, %p81
      %p83 = scmp.ne.s32.totalorder %s71, %s72
      %p84 = scmp.eq.s32.totalorder %s20, 2
      %p85 = por %p83, %p84
      %p87 = scmp.ne.s32.totalorder %s72, %s86
      %p88 = scmp.eq.s32.totalorder %s20, 0
      %p89 = por %p87, %p88
      %s91 = sadd.s32 %s90, 1
      %p94 = scmp.eq.s32.totalorder %s14, 2
      %p95 = scmp.ne.s32.totalorder %s90, %s92
      %p96 = scmp.eq.s32.totalorder %s14, 0
      %p97 = por %p95, %p96
      %p98 = scmp.ne.s32.totalorder %s90, %s92
      %p99 = scmp.eq.s32.totalorder %s19, 2
      %p100 = por %p98, %p99
      %p101 = scmp.ne.s32.totalorder %s92, %s93
      %p102 = scmp.eq.s32.totalorder %s19, 0
      %p103 = por %p101, %p102
      %p104 = scmp.ne.s32.totalorder %s92, %s93
      %p105 = scmp.eq.s32.totalorder %s20, 2
      %p106 = por %p104, %p105
      %p108 = scmp.ne.s32.totalorder %s93, %s107
      %p109 = scmp.eq.s32.totalorder %s20, 0
      %p110 = por %p108, %p109
      %s112 = sadd.s32 %s111, 1
      %p115 = scmp.eq.s32.totalorder %s14, 2
      %p116 = scmp.ne.s32.totalorder %s111, %s113
      %p117 = scmp.eq.s32.totalorder %s14, 0
      %p118 = por %p116, %p117
      %p119 = scmp.ne.s32.totalorder %s111, %s113
      %p120 = scmp.eq.s32.totalorder %s19, 2
      %p121 = por %p119, %p120
      %p122 = scmp.ne.s32.totalorder %s113, %s114
      %p123 = scmp.eq.s32.totalorder %s19, 0
      %p124 = por %p122, %p123
      %p125 = scmp.ne.s32.totalorder %s113, %s114
      %p126 = scmp.eq.s32.totalorder %s20, 2
      %p127 = por %p125, %p126
      %p129 = scmp.ne.s32.totalorder %s114, %s128
      %p130 = scmp.eq.s32.totalorder %s20, 0
      %p131 = por %p129, %p130
      %s132 = ssub.s32 %s14, %s21
      %p133 = scmp.eq.s32.totalorder %s132, 0
      %s135 = sadd.s32 %s134, 1
      %s136 = scalar_select %p133, %s134, %s135
      %p139 = pneg %p133
      %p140 = scmp.eq.s32.totalorder %s14, 2
      %p141 = por %p139, %p140
      %p142 = scmp.ne.s32.totalorder %s134, %s137
      %p143 = scmp.eq.s32.totalorder %s14, 0
      %p144 = por %p142, %p143
      %p145 = scmp.ne.s32.totalorder %s134, %s137
      %p146 = scmp.eq.s32.totalorder %s19, 2
      %p147 = por %p145, %p146
      %p148 = scmp.ne.s32.totalorder %s137, %s138
      %p149 = scmp.eq.s32.totalorder %s19, 0
      %p150 = por %p148, %p149
      %p151 = scmp.ne.s32.totalorder %s137, %s138
      %p152 = scmp.eq.s32.totalorder %s20, 2
      %p153 = por %p151, %p152
      %p155 = scmp.ne.s32.totalorder %s138, %s154
      %p156 = scmp.eq.s32.totalorder %s20, 0
      %p157 = por %p155, %p156
      %p158 = scmp.le.s32.totalorder 1, %s14
      %p159 = scmp.lt.s32.totalorder %s14, 4
      %p160 = pnand %p158, %p159
      %p161 = pneg %p160
      // Predicated region
      $region9: #{tpu_custom_call.1} parent=5 // pred_check
        _
      $region10: #{tpu_custom_call.1} parent=5 // pred_check_branch
        %163 = sbr.rel (%p160) target = $region12
      $region11: #{tpu_custom_call.1} parent=5 // pred_region
        %s164 = ssub.s32 %s14, 1
        // Predicated region
        $region13: #{tpu_custom_call.1} parent=11 // pred_check
          %p165 = pneg %p61
        $region14: #{tpu_custom_call.1} parent=11 // pred_check_branch
          %167 = sbr.rel (%p165) target = $region16
        $region15: #{tpu_custom_call.1} parent=11 // pred_region
          _
        $region16: #{tpu_custom_call.1} parent=11 // pred_fallthru
          _
        // Predicated region
        $region17: #{tpu_custom_call.1} parent=11 // pred_check
          %p168 = pneg %p82
        $region18: #{tpu_custom_call.1} parent=11 // pred_check_branch
          %170 = sbr.rel (%p168) target = $region20
        $region19: #{tpu_custom_call.1} parent=11 // pred_region
          _
        $region20: #{tpu_custom_call.1} parent=11 // pred_fallthru
          _
        // Predicated region
        $region21: #{tpu_custom_call.1} parent=11 // pred_check
          %p171 = pneg %p103
        $region22: #{tpu_custom_call.1} parent=11 // pred_check_branch
          %173 = sbr.rel (%p171) target = $region24
        $region23: #{tpu_custom_call.1} parent=11 // pred_region
          _
        $region24: #{tpu_custom_call.1} parent=11 // pred_fallthru
          _
        // Predicated region
        $region25: #{tpu_custom_call.1} parent=11 // pred_check
          %p174 = pneg %p124
        $region26: #{tpu_custom_call.1} parent=11 // pred_check_branch
          %176 = sbr.rel (%p174) target = $region28
        $region27: #{tpu_custom_call.1} parent=11 // pred_region
          _
        $region28: #{tpu_custom_call.1} parent=11 // pred_fallthru
          _
      $region12: #{tpu_custom_call.1} parent=5 // pred_fallthru
        _
      %p177 = scmp.lt.s32.totalorder %s14, 3
      // Predicated region
      $region29: #{tpu_custom_call.1} parent=5 // pred_check
        %p178 = pneg %p177
      $region30: #{tpu_custom_call.1} parent=5 // pred_check_branch
        %180 = sbr.rel (%p178) target = $region32
      $region31: #{tpu_custom_call.1} parent=5 // pred_region
        // Predicated region
        $region33: #{tpu_custom_call.1} parent=31 // pred_check
          %p181 = pneg %p34
        $region34: #{tpu_custom_call.1} parent=31 // pred_check_branch
          %183 = sbr.rel (%p181) target = $region36
        $region35: #{tpu_custom_call.1} parent=31 // pred_region
          %s184 = sand.u32 %s24, 1
          %s185 = scalar_lea.sflag [#allocation3], %s184
          %s186 = sand.u32 %s24, 1
          %s187 = smul.addr %s186, 256
          %s188 = scalar_lea.vmem [#allocation2], %s187
          %s189 = smul.u32 16, %s14
          %s190 = ssub.s32 38, %s189
          %p191 = scmp.lt.s32.totalorder %s190, 16
          %s192 = scalar_select %p191, %s190, 16
          %s193 = smul.u32 128, %s192
          %s194 = smul.u32 %s193, 2
          %s196 = ssub.s32 4096, %s194
          %197 = vsyncadd %s185, %s196
          %p198 = scmp.ne.s32.totalorder 0, %s194
          %s199 = smul.addr %s189, 2
          %s200 = smul.addr %s199, 128
          %s201 = scalar_lea.hbm %s0, %s200
          %s202 = smul.u32 16, %s192
          %s203 = sshll.u32 %s188, 4
          %s204 = int_to_ptr.vmem [resolvable:$true] %s203
          %s205 = sshll.u32 %s202, 4
          %209 = dma.hbm_to_vmem [thread:$0]  (%p198), %s201, %s205, %s204, %s185, 256, 256, 16
        $region36: #{tpu_custom_call.1} parent=31 // pred_fallthru
          _
      $region32: #{tpu_custom_call.1} parent=5 // pred_fallthru
        _
      %p210 = scmp.le.s32.totalorder 1, %s14
      %p211 = scmp.lt.s32.totalorder %s14, 4
      %p212 = pnand %p210, %p211
      %p213 = pneg %p212
      // Predicated region
      $region37: #{tpu_custom_call.1} parent=5 // pred_check
        _
      $region38: #{tpu_custom_call.1} parent=5 // pred_check_branch
        %215 = sbr.rel (%p212) target = $region40
      $region39: #{tpu_custom_call.1} parent=5 // pred_region
        %s216 = ssub.s32 %s14, 1
        %s217 = sand.u32 %s27, 1
        %s218 = scalar_lea.sflag [#allocation3], %s217
        %s219 = sand.u32 %s27, 1
        %s220 = smul.addr %s219, 256
        %s221 = scalar_lea.vmem [#allocation2], %s220
        // Predicated region
        $region41: #{tpu_custom_call.1} parent=39 // pred_check
          %p222 = pneg %p40
        $region42: #{tpu_custom_call.1} parent=39 // pred_check_branch
          %224 = sbr.rel (%p222) target = $region44
        $region43: #{tpu_custom_call.1} parent=39 // pred_region
          %225 = dma.done %s218, 4096
        $region44: #{tpu_custom_call.1} parent=39 // pred_fallthru
          _
        %s226 = sand.u32 %s27, 1
        %s227 = scalar_lea.sflag [#allocation3], %s226
        %s228 = sand.u32 %s27, 1
        %s229 = smul.addr %s228, 256
        %s230 = scalar_lea.vmem [#allocation2], %s229
        %p231 = pneg %p40
        %p232 = pneg %p37
        %p233 = pneg %p61
        %p234 = pneg %p58
        %p235 = pneg %p82
        %p236 = pneg %p79
        %p237 = pneg %p103
        %p238 = pneg %p100
        %p239 = pneg %p124
        %p240 = pneg %p121
        %p241 = pneg %p150
        %p242 = pneg %p147
        %s243 = sand.u32 %s137, 1
        %s244 = sand.u32 %s137, 1
        %s245 = smul.addr %s244, 128
        %s246 = scalar_lea.vmem [#allocation4], %s245
        %s247 = smul.u32 16, %s19
        %s248 = ssub.s32 38, %s247
        %p249 = scmp.lt.s32.totalorder %s248, 16
        %s250 = scalar_select %p249, %s248, 16
        %s251 = smul.u32 128, %s250
        %s252 = smul.u32 %s251, 2
        %s253 = smul.u32 16, %s19
        %s254 = ssub.s32 38, %s253
        %p255 = scmp.lt.s32.totalorder %s254, 16
        %s256 = scalar_select %p255, %s254, 16
        %s257 = smul.u32 128, %s256
        %v258 = vld [vmem:[%s221] sm:$0xff]
        %v259 = vld [vmem:[%s221 + $0x8] sm:$0xff]
        %v260 = vld [vmem:[%s221 + $0x10] sm:$0xff]
        %v261 = vld [vmem:[%s221 + $0x18] sm:$0xff]
        %v262 = vld [vmem:[%s221 + $0x20] sm:$0xff]
        %v263 = vld [vmem:[%s221 + $0x28] sm:$0xff]
        %v264 = vld [vmem:[%s221 + $0x30] sm:$0xff]
        %v265 = vld [vmem:[%s221 + $0x38] sm:$0xff]
        %v266 = vld [vmem:[%s221 + $0x40] sm:$0xff]
        %v267 = vld [vmem:[%s221 + $0x48] sm:$0xff]
        %v268 = vld [vmem:[%s221 + $0x50] sm:$0xff]
        %v269 = vld [vmem:[%s221 + $0x58] sm:$0xff]
        %v270 = vld [vmem:[%s221 + $0x60] sm:$0xff]
        %v271 = vld [vmem:[%s221 + $0x68] sm:$0xff]
        %v272 = vld [vmem:[%s221 + $0x70] sm:$0xff]
        %v273 = vld [vmem:[%s221 + $0x78] sm:$0xff]
        %v274 = vld [vmem:[%s221 + $0x80] sm:$0xff]
        %v275 = vld [vmem:[%s221 + $0x88] sm:$0xff]
        %v276 = vld [vmem:[%s221 + $0x90] sm:$0xff]
        %v277 = vld [vmem:[%s221 + $0x98] sm:$0xff]
        %v278 = vld [vmem:[%s221 + $0xa0] sm:$0xff]
        %v279 = vld [vmem:[%s221 + $0xa8] sm:$0xff]
        %v280 = vld [vmem:[%s221 + $0xb0] sm:$0xff]
        %v281 = vld [vmem:[%s221 + $0xb8] sm:$0xff]
        %v282 = vld [vmem:[%s221 + $0xc0] sm:$0xff]
        %v283 = vld [vmem:[%s221 + $0xc8] sm:$0xff]
        %v284 = vld [vmem:[%s221 + $0xd0] sm:$0xff]
        %v285 = vld [vmem:[%s221 + $0xd8] sm:$0xff]
        %v286 = vld [vmem:[%s221 + $0xe0] sm:$0xff]
        %v287 = vld [vmem:[%s221 + $0xe8] sm:$0xff]
        %v288 = vld [vmem:[%s221 + $0xf0] sm:$0xff]
        %v289 = vld [vmem:[%s221 + $0xf8] sm:$0xff]
        %v290 = vmax.f32 %v258, 0.0
        %v291 = vmax.f32 %v259, 0.0
        %v292 = vmax.f32 %v260, 0.0
        %v293 = vmax.f32 %v261, 0.0
        %v294 = vmax.f32 %v262, 0.0
        %v295 = vmax.f32 %v263, 0.0
        %v296 = vmax.f32 %v264, 0.0
        %v297 = vmax.f32 %v265, 0.0
        %v298 = vmax.f32 %v266, 0.0
        %v299 = vmax.f32 %v267, 0.0
        %v300 = vmax.f32 %v268, 0.0
        %v301 = vmax.f32 %v269, 0.0
        %v302 = vmax.f32 %v270, 0.0
        %v303 = vmax.f32 %v271, 0.0
        %v304 = vmax.f32 %v272, 0.0
        %v305 = vmax.f32 %v273, 0.0
        %v306 = vmax.f32 %v274, 0.0
        %v307 = vmax.f32 %v275, 0.0
        %v308 = vmax.f32 %v276, 0.0
        %v309 = vmax.f32 %v277, 0.0
        %v310 = vmax.f32 %v278, 0.0
        %v311 = vmax.f32 %v279, 0.0
        %v312 = vmax.f32 %v280, 0.0
        %v313 = vmax.f32 %v281, 0.0
        %v314 = vmax.f32 %v282, 0.0
        %v315 = vmax.f32 %v283, 0.0
        %v316 = vmax.f32 %v284, 0.0
        %v317 = vmax.f32 %v285, 0.0
        %v318 = vmax.f32 %v286, 0.0
        %v319 = vmax.f32 %v287, 0.0
        %v320 = vmax.f32 %v288, 0.0
        %v321 = vmax.f32 %v289, 0.0
        %v322 = vld [vmem:[%s1] sm:$0xff]
        %v323 = vld [vmem:[%s1 + $0x8] sm:$0xff]
        %v324 = vld [vmem:[%s1 + $0x10] sm:$0xff]
        %v325 = vld [vmem:[%s1 + $0x18] sm:$0xff]
        %v326 = vld [vmem:[%s1 + $0x20] sm:$0xff]
        %v327 = vld [vmem:[%s1 + $0x28] sm:$0xff]
        %v328 = vld [vmem:[%s1 + $0x30] sm:$0xff]
        %v329 = vld [vmem:[%s1 + $0x38] sm:$0xff]
        %v330 = vld [vmem:[%s1 + $0x40] sm:$0xff]
        %v331 = vld [vmem:[%s1 + $0x48] sm:$0xff]
        %v332 = vld [vmem:[%s1 + $0x50] sm:$0xff]
        %v333 = vld [vmem:[%s1 + $0x58] sm:$0xff]
        %v334 = vld [vmem:[%s1 + $0x60] sm:$0xff]
        %v335 = vld [vmem:[%s1 + $0x68] sm:$0xff]
        %v336 = vld [vmem:[%s1 + $0x70] sm:$0xff]
        %v337 = vld [vmem:[%s1 + $0x78] sm:$0xff]
        %v338 = vld [vmem:[%s1 + $0x80] sm:$0xff]
        %v339 = vld [vmem:[%s1 + $0x88] sm:$0xff]
        %v340 = vld [vmem:[%s1 + $0x90] sm:$0xff]
        %v341 = vld [vmem:[%s1 + $0x98] sm:$0xff]
        %v342 = vld [vmem:[%s1 + $0xa0] sm:$0xff]
        %v343 = vld [vmem:[%s1 + $0xa8] sm:$0xff]
        %v344 = vld [vmem:[%s1 + $0xb0] sm:$0xff]
        %v345 = vld [vmem:[%s1 + $0xb8] sm:$0xff]
        %v346 = vld [vmem:[%s1 + $0xc0] sm:$0xff]
        %v347 = vld [vmem:[%s1 + $0xc8] sm:$0xff]
        %v348 = vld [vmem:[%s1 + $0xd0] sm:$0xff]
        %v349 = vld [vmem:[%s1 + $0xd8] sm:$0xff]
        %v350 = vld [vmem:[%s1 + $0xe0] sm:$0xff]
        %v351 = vld [vmem:[%s1 + $0xe8] sm:$0xff]
        %v352 = vld [vmem:[%s1 + $0xf0] sm:$0xff]
        %v353 = vld [vmem:[%s1 + $0xf8] sm:$0x3]
        %v354 = vld [vmem:[%s2] sm:$0x1]
        %v356 = vlaneseq
        %v357 = vshrl.u32 %v356, 7
        %v358 = vsub.s32 0, %v357
        %v359 = vrot.slane %v354, %v358
        %vm361 = vcmask 998400
        %v363 = vsel %vm361, %v291, 0
        %v366 = vsel %vm361, %v293, 0
        %v369 = vsel %vm361, %v295, 0
        %v372 = vsel %vm361, %v297, 0
        %v375 = vsel %vm361, %v299, 0
        %v378 = vsel %vm361, %v301, 0
        %v381 = vsel %vm361, %v303, 0
        %v384 = vsel %vm361, %v305, 0
        %v387 = vsel %vm361, %v307, 0
        %v390 = vsel %vm361, %v309, 0
        %v393 = vsel %vm361, %v311, 0
        %v396 = vsel %vm361, %v313, 0
        %v399 = vsel %vm361, %v315, 0
        %v402 = vsel %vm361, %v317, 0
        %v405 = vsel %vm361, %v319, 0
        %v408 = vsel %vm361, %v321, 0
        %vm410 = vcmask 1041408
        %v412 = vsel %vm410, %v353, 0
        %414 = vmatprep.subr.mxu0 0.0
        %415 = vmatpush1.msra.mxu0 %v322
        %416 = vmatprep.subr.mxu0 0.0
        %417 = vmatpush1.msra.mxu0 %v323
        %418 = vmatprep.subr.mxu0 0.0
        %419 = vmatpush1.msra.mxu0 %v324
        %420 = vmatprep.subr.mxu0 0.0
        %421 = vmatpush1.msra.mxu0 %v325
        %422 = vmatprep.subr.mxu0 0.0
        %423 = vmatpush1.msra.mxu0 %v326
        %424 = vmatprep.subr.mxu0 0.0
        %425 = vmatpush1.msra.mxu0 %v327
        %426 = vmatprep.subr.mxu0 0.0
        %427 = vmatpush1.msra.mxu0 %v328
        %428 = vmatprep.subr.mxu0 0.0
        %429 = vmatpush1.msra.mxu0 %v329
        %430 = vmatprep.subr.mxu0 0.0
        %431 = vmatpush1.msra.mxu0 %v330
        %432 = vmatprep.subr.mxu0 0.0
        %433 = vmatpush1.msra.mxu0 %v331
        %434 = vmatprep.subr.mxu0 0.0
        %435 = vmatpush1.msra.mxu0 %v332
        %436 = vmatprep.subr.mxu0 0.0
        %437 = vmatpush1.msra.mxu0 %v333
        %438 = vmatprep.subr.mxu0 0.0
        %439 = vmatpush1.msra.mxu0 %v334
        %440 = vmatprep.subr.mxu0 0.0
        %441 = vmatpush1.msra.mxu0 %v335
        %442 = vmatprep.subr.mxu0 0.0
        %443 = vmatpush1.msra.mxu0 %v336
        %444 = vmatprep.subr.mxu0 0.0
        %445 = vmatpush1.msra.mxu0 %v337
        %446 = vmatprep.subr.mxu0 0.0
        %447 = vmatpush1.msra.mxu0 %v338
        %448 = vmatprep.subr.mxu0 0.0
        %449 = vmatpush1.msra.mxu0 %v339
        %450 = vmatprep.subr.mxu0 0.0
        %451 = vmatpush1.msra.mxu0 %v340
        %452 = vmatprep.subr.mxu0 0.0
        %453 = vmatpush1.msra.mxu0 %v341
        %454 = vmatprep.subr.mxu0 0.0
        %455 = vmatpush1.msra.mxu0 %v342
        %456 = vmatprep.subr.mxu0 0.0
        %457 = vmatpush1.msra.mxu0 %v343
        %458 = vmatprep.subr.mxu0 0.0
        %459 = vmatpush1.msra.mxu0 %v344
        %460 = vmatprep.subr.mxu0 0.0
        %461 = vmatpush1.msra.mxu0 %v345
        %462 = vmatprep.subr.mxu0 0.0
        %463 = vmatpush1.msra.mxu0 %v346
        %464 = vmatprep.subr.mxu0 0.0
        %465 = vmatpush1.msra.mxu0 %v347
        %466 = vmatprep.subr.mxu0 0.0
        %467 = vmatpush1.msra.mxu0 %v348
        %468 = vmatprep.subr.mxu0 0.0
        %469 = vmatpush1.msra.mxu0 %v349
        %470 = vmatprep.subr.mxu0 0.0
        %471 = vmatpush1.msra.mxu0 %v350
        %472 = vmatprep.subr.mxu0 0.0
        %473 = vmatpush1.msra.mxu0 %v351
        %474 = vmatprep.subr.mxu0 0.0
        %475 = vmatpush1.msra.mxu0 %v352
        %476 = vmatprep.subr.mxu0 0.0
        %477 = vmatpush1.msra.mxu0 %v412
        %478 = vmatprep.mubr.f32.mxu0 %v363
        %479 = vmatmul.mubr.f32.gmra.mrb[0].mxu0 %v290
        %v480 = vpop.f32.mrb[0].mxu0
        %v481 = vadd.f32 %v359, %v480
        %v482 = vpop.f32.mrb[0].mxu0
        %483 = vmatprep.mubr.f32.mxu0 %v366
        %484 = vmatmul.mubr.f32.gmra.mrb[0].mxu0 %v292
        %v485 = vpop.f32.mrb[0].mxu0
        %v486 = vadd.f32 %v359, %v485
        %v487 = vpop.f32.mrb[0].mxu0
        %488 = vmatprep.mubr.f32.mxu0 %v369
        %489 = vmatmul.mubr.f32.gmra.mrb[0].mxu0 %v294
        %v490 = vpop.f32.mrb[0].mxu0
        %v491 = vadd.f32 %v359, %v490
        %v492 = vpop.f32.mrb[0].mxu0
        %493 = vmatprep.mubr.f32.mxu0 %v372
        %494 = vmatmul.mubr.f32.gmra.mrb[0].mxu0 %v296
        %v495 = vpop.f32.mrb[0].mxu0
        %v496 = vadd.f32 %v359, %v495
        %v497 = vpop.f32.mrb[0].mxu0
        %498 = vmatprep.mubr.f32.mxu0 %v375
        %499 = vmatmul.mubr.f32.gmra.mrb[0].mxu0 %v298
        %v500 = vpop.f32.mrb[0].mxu0
        %v501 = vadd.f32 %v359, %v500
        %v502 = vpop.f32.mrb[0].mxu0
        %503 = vmatprep.mubr.f32.mxu0 %v378
        %504 = vmatmul.mubr.f32.gmra.mrb[0].mxu0 %v300
        %v505 = vpop.f32.mrb[0].mxu0
        %v506 = vadd.f32 %v359, %v505
        %v507 = vpop.f32.mrb[0].mxu0
        %508 = vmatprep.mubr.f32.mxu0 %v381
        %509 = vmatmul.mubr.f32.gmra.mrb[0].mxu0 %v302
        %v510 = vpop.f32.mrb[0].mxu0
        %v511 = vadd.f32 %v359, %v510
        %v512 = vpop.f32.mrb[0].mxu0
        %513 = vmatprep.mubr.f32.mxu0 %v384
        %514 = vmatmul.mubr.f32.gmra.mrb[0].mxu0 %v304
        %v515 = vpop.f32.mrb[0].mxu0
        %v516 = vadd.f32 %v359, %v515
        %v517 = vpop.f32.mrb[0].mxu0
        %518 = vmatprep.mubr.f32.mxu0 %v387
        %519 = vmatmul.mubr.f32.gmra.mrb[0].mxu0 %v306
        %v520 = vpop.f32.mrb[0].mxu0
        %v521 = vadd.f32 %v359, %v520
        %v522 = vpop.f32.mrb[0].mxu0
        %523 = vmatprep.mubr.f32.mxu0 %v390
        %524 = vmatmul.mubr.f32.gmra.mrb[0].mxu0 %v308
        %v525 = vpop.f32.mrb[0].mxu0
        %v526 = vadd.f32 %v359, %v525
        %v527 = vpop.f32.mrb[0].mxu0
        %528 = vmatprep.mubr.f32.mxu0 %v393
        %529 = vmatmul.mubr.f32.gmra.mrb[0].mxu0 %v310
        %v530 = vpop.f32.mrb[0].mxu0
        %v531 = vadd.f32 %v359, %v530
        %v532 = vpop.f32.mrb[0].mxu0
        %533 = vmatprep.mubr.f32.mxu0 %v396
        %534 = vmatmul.mubr.f32.gmra.mrb[0].mxu0 %v312
        %v535 = vpop.f32.mrb[0].mxu0
        %v536 = vadd.f32 %v359, %v535
        %v537 = vpop.f32.mrb[0].mxu0
        %538 = vmatprep.mubr.f32.mxu0 %v399
        %539 = vmatmul.mubr.f32.gmra.mrb[0].mxu0 %v314
        %v540 = vpop.f32.mrb[0].mxu0
        %v541 = vadd.f32 %v359, %v540
        %v542 = vpop.f32.mrb[0].mxu0
        %543 = vmatprep.mubr.f32.mxu0 %v402
        %544 = vmatmul.mubr.f32.gmra.mrb[0].mxu0 %v316
        %v545 = vpop.f32.mrb[0].mxu0
        %v546 = vadd.f32 %v359, %v545
        %v547 = vpop.f32.mrb[0].mxu0
        %548 = vmatprep.mubr.f32.mxu0 %v405
        %549 = vmatmul.mubr.f32.gmra.mrb[0].mxu0 %v318
        %v550 = vpop.f32.mrb[0].mxu0
        %v551 = vadd.f32 %v359, %v550
        %v552 = vpop.f32.mrb[0].mxu0
        %553 = vmatprep.mubr.f32.mxu0 %v408
        %554 = vmatmul.mubr.f32.gmra.mrb[0].mxu0 %v320
        %v555 = vpop.f32.mrb[0].mxu0
        %v556 = vadd.f32 %v359, %v555
        %v557 = vpop.f32.mrb[0].mxu0
        %558 = vdwg.mxu0
        %v559 = vmax.f32 %v481, 0.0
        %v560 = vmax.f32 %v486, 0.0
        %v561 = vmax.f32 %v491, 0.0
        %v562 = vmax.f32 %v496, 0.0
        %v563 = vmax.f32 %v501, 0.0
        %v564 = vmax.f32 %v506, 0.0
        %v565 = vmax.f32 %v511, 0.0
        %v566 = vmax.f32 %v516, 0.0
        %v567 = vmax.f32 %v521, 0.0
        %v568 = vmax.f32 %v526, 0.0
        %v569 = vmax.f32 %v531, 0.0
        %v570 = vmax.f32 %v536, 0.0
        %v571 = vmax.f32 %v541, 0.0
        %v572 = vmax.f32 %v546, 0.0
        %v573 = vmax.f32 %v551, 0.0
        %v574 = vmax.f32 %v556, 0.0
        %v575 = vld [vmem:[%s3] sm:$0xff]
        %v576 = vld [vmem:[%s3 + $0x8] sm:$0xff]
        %v577 = vld [vmem:[%s3 + $0x10] sm:$0xff]
        %v578 = vld [vmem:[%s3 + $0x18] sm:$0xff]
        %v579 = vld [vmem:[%s3 + $0x20] sm:$0xff]
        %v580 = vld [vmem:[%s3 + $0x28] sm:$0xff]
        %v581 = vld [vmem:[%s3 + $0x30] sm:$0x3]
        %v582 = vld [vmem:[%s4] sm:$0x1]
        %v584 = vlaneseq
        %v585 = vshrl.u32 %v584, 7
        %v586 = vsub.s32 0, %v585
        %v587 = vrot.slane %v582, %v586
        %vm589 = vcmask 408576
        %v591 = vsel %vm589, %v559, 0
        %v594 = vsel %vm589, %v560, 0
        %v597 = vsel %vm589, %v561, 0
        %v600 = vsel %vm589, %v562, 0
        %v603 = vsel %vm589, %v563, 0
        %v606 = vsel %vm589, %v564, 0
        %v609 = vsel %vm589, %v565, 0
        %v612 = vsel %vm589, %v566, 0
        %v615 = vsel %vm589, %v567, 0
        %v618 = vsel %vm589, %v568, 0
        %v621 = vsel %vm589, %v569, 0
        %v624 = vsel %vm589, %v570, 0
        %v627 = vsel %vm589, %v571, 0
        %v630 = vsel %vm589, %v572, 0
        %v633 = vsel %vm589, %v573, 0
        %v636 = vsel %vm589, %v574, 0
        %v639 = vsel %vm410, %v581, 0
        %641 = vmatprep.subr.mxu0 0.0
        %642 = vmatpush1.msra.mxu0 %v575
        %643 = vmatprep.subr.mxu0 0.0
        %644 = vmatpush1.msra.mxu0 %v576
        %645 = vmatprep.subr.mxu0 0.0
        %646 = vmatpush1.msra.mxu0 %v577
        %647 = vmatprep.subr.mxu0 0.0
        %648 = vmatpush1.msra.mxu0 %v578
        %649 = vmatprep.subr.mxu0 0.0
        %650 = vmatpush1.msra.mxu0 %v579
        %651 = vmatprep.subr.mxu0 0.0
        %652 = vmatpush1.msra.mxu0 %v580
        %653 = vmatprep.subr.mxu0 0.0
        %654 = vmatpush1.msra.mxu0 %v639
        %655 = vmatprep.subr.mxu0 0.0
        %656 = vmatpush1.msra.mxu0 0.0
        %657 = vmatprep.subr.mxu0 0.0
        %658 = vmatpush1.msra.mxu0 0.0
        %659 = vmatprep.subr.mxu0 0.0
        %660 = vmatpush1.msra.mxu0 0.0
        %661 = vmatprep.subr.mxu0 0.0
        %662 = vmatpush1.msra.mxu0 0.0
        %663 = vmatprep.subr.mxu0 0.0
        %664 = vmatpush1.msra.mxu0 0.0
        %665 = vmatprep.subr.mxu0 0.0
        %666 = vmatpush1.msra.mxu0 0.0
        %667 = vmatprep.subr.mxu0 0.0
        %668 = vmatpush1.msra.mxu0 0.0
        %669 = vmatprep.subr.mxu0 0.0
        %670 = vmatpush1.msra.mxu0 0.0
        %671 = vmatprep.subr.mxu0 0.0
        %672 = vmatpush1.msra.mxu0 0.0
        %673 = vmatprep.subr.mxu0 0.0
        %674 = vmatpush1.msra.mxu0 0.0
        %675 = vmatprep.subr.mxu0 0.0
        %676 = vmatpush1.msra.mxu0 0.0
        %677 = vmatprep.subr.mxu0 0.0
        %678 = vmatpush1.msra.mxu0 0.0
        %679 = vmatprep.subr.mxu0 0.0
        %680 = vmatpush1.msra.mxu0 0.0
        %681 = vmatprep.subr.mxu0 0.0
        %682 = vmatpush1.msra.mxu0 0.0
        %683 = vmatprep.subr.mxu0 0.0
        %684 = vmatpush1.msra.mxu0 0.0
        %685 = vmatprep.subr.mxu0 0.0
        %686 = vmatpush1.msra.mxu0 0.0
        %687 = vmatprep.subr.mxu0 0.0
        %688 = vmatpush1.msra.mxu0 0.0
        %689 = vmatprep.subr.mxu0 0.0
        %690 = vmatpush1.msra.mxu0 0.0
        %691 = vmatprep.subr.mxu0 0.0
        %692 = vmatpush1.msra.mxu0 0.0
        %693 = vmatprep.subr.mxu0 0.0
        %694 = vmatpush1.msra.mxu0 0.0
        %695 = vmatprep.subr.mxu0 0.0
        %696 = vmatpush1.msra.mxu0 0.0
        %697 = vmatprep.subr.mxu0 0.0
        %698 = vmatpush1.msra.mxu0 0.0
        %699 = vmatprep.subr.mxu0 0.0
        %700 = vmatpush1.msra.mxu0 0.0
        %701 = vmatprep.subr.mxu0 0.0
        %702 = vmatpush1.msra.mxu0 0.0
        %703 = vmatprep.subr.mxu0 0.0
        %704 = vmatpush1.msra.mxu0 0.0
        %705 = vmatprep.mubr.f32.mxu0 0.0
        %706 = vmatmul.mubr.f32.gmra.mrb[0].mxu0 %v591
        %v707 = vpop.f32.mrb[0].mxu0
        %v708 = vadd.f32 %v587, %v707
        %v709 = vpop.f32.mrb[0].mxu0
        %710 = vmatprep.mubr.f32.mxu0 0.0
        %711 = vmatmul.mubr.f32.gmra.mrb[0].mxu0 %v594
        %v712 = vpop.f32.mrb[0].mxu0
        %v713 = vadd.f32 %v587, %v712
        %v714 = vpop.f32.mrb[0].mxu0
        %715 = vmatprep.mubr.f32.mxu0 0.0
        %716 = vmatmul.mubr.f32.gmra.mrb[0].mxu0 %v597
        %v717 = vpop.f32.mrb[0].mxu0
        %v718 = vadd.f32 %v587, %v717
        %v719 = vpop.f32.mrb[0].mxu0
        %720 = vmatprep.mubr.f32.mxu0 0.0
        %721 = vmatmul.mubr.f32.gmra.mrb[0].mxu0 %v600
        %v722 = vpop.f32.mrb[0].mxu0
        %v723 = vadd.f32 %v587, %v722
        %v724 = vpop.f32.mrb[0].mxu0
        %725 = vmatprep.mubr.f32.mxu0 0.0
        %726 = vmatmul.mubr.f32.gmra.mrb[0].mxu0 %v603
        %v727 = vpop.f32.mrb[0].mxu0
        %v728 = vadd.f32 %v587, %v727
        %v729 = vpop.f32.mrb[0].mxu0
        %730 = vmatprep.mubr.f32.mxu0 0.0
        %731 = vmatmul.mubr.f32.gmra.mrb[0].mxu0 %v606
        %v732 = vpop.f32.mrb[0].mxu0
        %v733 = vadd.f32 %v587, %v732
        %v734 = vpop.f32.mrb[0].mxu0
        %735 = vmatprep.mubr.f32.mxu0 0.0
        %736 = vmatmul.mubr.f32.gmra.mrb[0].mxu0 %v609
        %v737 = vpop.f32.mrb[0].mxu0
        %v738 = vadd.f32 %v587, %v737
        %v739 = vpop.f32.mrb[0].mxu0
        %740 = vmatprep.mubr.f32.mxu0 0.0
        %741 = vmatmul.mubr.f32.gmra.mrb[0].mxu0 %v612
        %v742 = vpop.f32.mrb[0].mxu0
        %v743 = vadd.f32 %v587, %v742
        %v744 = vpop.f32.mrb[0].mxu0
        %745 = vmatprep.mubr.f32.mxu0 0.0
        %746 = vmatmul.mubr.f32.gmra.mrb[0].mxu0 %v615
        %v747 = vpop.f32.mrb[0].mxu0
        %v748 = vadd.f32 %v587, %v747
        %v749 = vpop.f32.mrb[0].mxu0
        %750 = vmatprep.mubr.f32.mxu0 0.0
        %751 = vmatmul.mubr.f32.gmra.mrb[0].mxu0 %v618
        %v752 = vpop.f32.mrb[0].mxu0
        %v753 = vadd.f32 %v587, %v752
        %v754 = vpop.f32.mrb[0].mxu0
        %755 = vmatprep.mubr.f32.mxu0 0.0
        %756 = vmatmul.mubr.f32.gmra.mrb[0].mxu0 %v621
        %v757 = vpop.f32.mrb[0].mxu0
        %v758 = vadd.f32 %v587, %v757
        %v759 = vpop.f32.mrb[0].mxu0
        %760 = vmatprep.mubr.f32.mxu0 0.0
        %761 = vmatmul.mubr.f32.gmra.mrb[0].mxu0 %v624
        %v762 = vpop.f32.mrb[0].mxu0
        %v763 = vadd.f32 %v587, %v762
        %v764 = vpop.f32.mrb[0].mxu0
        %765 = vmatprep.mubr.f32.mxu0 0.0
        %766 = vmatmul.mubr.f32.gmra.mrb[0].mxu0 %v627
        %v767 = vpop.f32.mrb[0].mxu0
        %v768 = vadd.f32 %v587, %v767
        %v769 = vpop.f32.mrb[0].mxu0
        %770 = vmatprep.mubr.f32.mxu0 0.0
        %771 = vmatmul.mubr.f32.gmra.mrb[0].mxu0 %v630
        %v772 = vpop.f32.mrb[0].mxu0
        %v773 = vadd.f32 %v587, %v772
        %v774 = vpop.f32.mrb[0].mxu0
        %775 = vmatprep.mubr.f32.mxu0 0.0
        %776 = vmatmul.mubr.f32.gmra.mrb[0].mxu0 %v633
        %v777 = vpop.f32.mrb[0].mxu0
        %v778 = vadd.f32 %v587, %v777
        %v779 = vpop.f32.mrb[0].mxu0
        %780 = vmatprep.mubr.f32.mxu0 0.0
        %781 = vmatmul.mubr.f32.gmra.mrb[0].mxu0 %v636
        %v782 = vpop.f32.mrb[0].mxu0
        %v783 = vadd.f32 %v587, %v782
        %v784 = vpop.f32.mrb[0].mxu0
        %785 = vdwg.mxu0
        %vm786 = vcmask 64512
        %787 = vst.msk [vmem:[%s246] sm:$0xff] %vm786, %v708
        %788 = vst.msk [vmem:[%s246 + $0x8] sm:$0xff] %vm786, %v713
        %789 = vst.msk [vmem:[%s246 + $0x10] sm:$0xff] %vm786, %v718
        %790 = vst.msk [vmem:[%s246 + $0x18] sm:$0xff] %vm786, %v723
        %791 = vst.msk [vmem:[%s246 + $0x20] sm:$0xff] %vm786, %v728
        %792 = vst.msk [vmem:[%s246 + $0x28] sm:$0xff] %vm786, %v733
        %793 = vst.msk [vmem:[%s246 + $0x30] sm:$0xff] %vm786, %v738
        %794 = vst.msk [vmem:[%s246 + $0x38] sm:$0xff] %vm786, %v743
        %795 = vst.msk [vmem:[%s246 + $0x40] sm:$0xff] %vm786, %v748
        %796 = vst.msk [vmem:[%s246 + $0x48] sm:$0xff] %vm786, %v753
        %797 = vst.msk [vmem:[%s246 + $0x50] sm:$0xff] %vm786, %v758
        %798 = vst.msk [vmem:[%s246 + $0x58] sm:$0xff] %vm786, %v763
        %799 = vst.msk [vmem:[%s246 + $0x60] sm:$0xff] %vm786, %v768
        %800 = vst.msk [vmem:[%s246 + $0x68] sm:$0xff] %vm786, %v773
        %801 = vst.msk [vmem:[%s246 + $0x70] sm:$0xff] %vm786, %v778
        %802 = vst.msk [vmem:[%s246 + $0x78] sm:$0xff] %vm786, %v783
        %s803 = sand.u32 %s137, 1
        %s804 = sand.u32 %s137, 1
        %s805 = smul.addr %s804, 128
        %s806 = scalar_lea.vmem [#allocation4], %s805
        // Predicated region
        $region45: #{tpu_custom_call.1} parent=39 // pred_check
          %p807 = pneg %p147
        $region46: #{tpu_custom_call.1} parent=39 // pred_check_branch
          %809 = sbr.rel (%p807) target = $region48
        $region47: #{tpu_custom_call.1} parent=39 // pred_region
          %s810 = smul.u32 16, %s19
          %s811 = ssub.s32 38, %s810
          %p812 = scmp.lt.s32.totalorder %s811, 16
          %s813 = scalar_select %p812, %s811, 16
          %s814 = smul.u32 128, %s813
          %p815 = scmp.ne.s32.totalorder 0, %s814
          %s816 = smul.addr %s810, 8
          %s817 = scalar_lea.vmem %s5, %s816
          // Predicated region
          $region49: #{tpu_custom_call.1} parent=47 // pred_check
            %p818 = pneg %p815
          $region50: #{tpu_custom_call.1} parent=47 // pred_check_branch
            %820 = sbr.rel (%p818) target = $region52
          $region51: #{tpu_custom_call.1} parent=47 // pred_region
            // Predicated region
            $region53: #{tpu_custom_call.1} parent=51 // pred_check
              _
            $region54: #{tpu_custom_call.1} parent=51 // pred_check_branch
              %822 = sbr.rel (0) target = $region56
            $region55: #{tpu_custom_call.1} parent=51 // pred_region
              // Predicated region
              $region75: #{tpu_custom_call.1} parent=55 // pred_check
                _
              $region76: #{tpu_custom_call.1} parent=55 // pred_check_branch
                %901 = sbr.rel (0) target = $region78
              $region77: #{tpu_custom_call.1} parent=55 // pred_region
                %s902 = sshrl.u32 %s813, 4
                // While loop
                $region79: #{tpu_custom_call.1} parent=77 // loop_pre_header
                  _
                $region80: #{tpu_custom_call.1} parent=77 // loop_header
                  %s904 = sphi 0, %s906
                  %p905 = scmp.ge.s32.totalorder %s904, %s902
                  %s909 = sphi 0, %s946
                  %s910 = sphi %s806, %s949
                  %s911 = sphi %s817, %s950
                $region81: #{tpu_custom_call.1} parent=77 // loop_header_branch
                  %908 = sbr.rel (%p905) target = $region85
                $region82: #{tpu_custom_call.1} parent=77 // loop_body
                  %v912 = vld [vmem:[%s910] sm:$0xff]
                  %913 = vst [vmem:[%s911] sm:$0xff] %v912
                  %v914 = vld [vmem:[%s910 + $0x8] sm:$0xff]
                  %915 = vst [vmem:[%s911 + $0x8] sm:$0xff] %v914
                  %v916 = vld [vmem:[%s910 + $0x10] sm:$0xff]
                  %917 = vst [vmem:[%s911 + $0x10] sm:$0xff] %v916
                  %v918 = vld [vmem:[%s910 + $0x18] sm:$0xff]
                  %919 = vst [vmem:[%s911 + $0x18] sm:$0xff] %v918
                  %v920 = vld [vmem:[%s910 + $0x20] sm:$0xff]
                  %921 = vst [vmem:[%s911 + $0x20] sm:$0xff] %v920
                  %v922 = vld [vmem:[%s910 + $0x28] sm:$0xff]
                  %923 = vst [vmem:[%s911 + $0x28] sm:$0xff] %v922
                  %v924 = vld [vmem:[%s910 + $0x30] sm:$0xff]
                  %925 = vst [vmem:[%s911 + $0x30] sm:$0xff] %v924
                  %v926 = vld [vmem:[%s910 + $0x38] sm:$0xff]
                  %927 = vst [vmem:[%s911 + $0x38] sm:$0xff] %v926
                  %v928 = vld [vmem:[%s910 + $0x40] sm:$0xff]
                  %929 = vst [vmem:[%s911 + $0x40] sm:$0xff] %v928
                  %v930 = vld [vmem:[%s910 + $0x48] sm:$0xff]
                  %931 = vst [vmem:[%s911 + $0x48] sm:$0xff] %v930
                  %v932 = vld [vmem:[%s910 + $0x50] sm:$0xff]
                  %933 = vst [vmem:[%s911 + $0x50] sm:$0xff] %v932
                  %v934 = vld [vmem:[%s910 + $0x58] sm:$0xff]
                  %935 = vst [vmem:[%s911 + $0x58] sm:$0xff] %v934
                  %v936 = vld [vmem:[%s910 + $0x60] sm:$0xff]
                  %937 = vst [vmem:[%s911 + $0x60] sm:$0xff] %v936
                  %v938 = vld [vmem:[%s910 + $0x68] sm:$0xff]
                  %939 = vst [vmem:[%s911 + $0x68] sm:$0xff] %v938
                  %v940 = vld [vmem:[%s910 + $0x70] sm:$0xff]
                  %941 = vst [vmem:[%s911 + $0x70] sm:$0xff] %v940
                  %v942 = vld [vmem:[%s910 + $0x78] sm:$0xff]
                  %943 = vst [vmem:[%s911 + $0x78] sm:$0xff] %v942
                  %s944 = sadd.s32 1, %s909
                  %p945 = scmp.ge.s32.totalorder %s944, %s902
                  %s946 = scalar_select %p945, 0, %s944
                  %s947 = smul.u32 %s946, 128
                  %s948 = smul.u32 %s946, 128
                  %s949 = scalar_lea.vmem %s806, %s947 [#allocation4]
                  %s950 = scalar_lea.vmem %s817, %s948
                $region83: #{tpu_custom_call.1} parent=77 // loop_footer
                  %s906 = sadd.s32 %s904, 1
                $region84: #{tpu_custom_call.1} parent=77 // loop_footer_branch
                  %903 = sbr.rel target = $region80
                $region85: #{tpu_custom_call.1} parent=77 // loop_exit
                  _
                %s951 = sshrl.u32 %s813, 4
                %s952 = sand.u32 %s813, 15
                %s953 = smul.u32 %s951, 16
                %s954 = smul.u32 8, %s953
                %s955 = scalar_lea.vmem %s806, %s954 [#allocation4]
                %s956 = smul.u32 8, %s953
                %s957 = scalar_lea.vmem %s817, %s956
                // While loop
                $region86: #{tpu_custom_call.1} parent=77 // loop_pre_header
                  _
                $region87: #{tpu_custom_call.1} parent=77 // loop_header
                  %s959 = sphi 0, %s961
                  %p960 = scmp.ge.s32.totalorder %s959, %s952
                  %s964 = sphi 0, %s971
                  %s965 = sphi %s955, %s974
                  %s966 = sphi %s957, %s975
                $region88: #{tpu_custom_call.1} parent=77 // loop_header_branch
                  %963 = sbr.rel (%p960) target = $region92
                $region89: #{tpu_custom_call.1} parent=77 // loop_body
                  %v967 = vld [vmem:[%s965] sm:$0xff]
                  %968 = vst [vmem:[%s966] sm:$0xff] %v967
                  %s969 = sadd.s32 1, %s964
                  %p970 = scmp.ge.s32.totalorder %s969, %s952
                  %s971 = scalar_select %p970, 0, %s969
                  %s972 = smul.u32 %s971, 8
                  %s973 = smul.u32 %s971, 8
                  %s974 = scalar_lea.vmem %s955, %s972 [#allocation4]
                  %s975 = scalar_lea.vmem %s957, %s973
                $region90: #{tpu_custom_call.1} parent=77 // loop_footer
                  %s961 = sadd.s32 %s959, 1
                $region91: #{tpu_custom_call.1} parent=77 // loop_footer_branch
                  %958 = sbr.rel target = $region87
                $region92: #{tpu_custom_call.1} parent=77 // loop_exit
                  _
              $region78: #{tpu_custom_call.1} parent=55 // pred_fallthru
                _
              // Predicated region
              $region93: #{tpu_custom_call.1} parent=55 // pred_check
                _
              $region94: #{tpu_custom_call.1} parent=55 // pred_check_branch
                %977 = sbr.rel target = $region96
              $region95: #{tpu_custom_call.1} parent=55 // pred_region
                _
              $region96: #{tpu_custom_call.1} parent=55 // pred_fallthru
                _
            $region56: #{tpu_custom_call.1} parent=51 // pred_fallthru
              _
            // Predicated region
            $region57: #{tpu_custom_call.1} parent=51 // pred_check
              _
            $region58: #{tpu_custom_call.1} parent=51 // pred_check_branch
              %824 = sbr.rel target = $region60
            $region59: #{tpu_custom_call.1} parent=51 // pred_region
              %s826 = sshrl.u32 %s813, 4
              // While loop
              $region61: #{tpu_custom_call.1} parent=59 // loop_pre_header
                _
              $region62: #{tpu_custom_call.1} parent=59 // loop_header
                %s828 = sphi 0, %s830
                %p829 = scmp.ge.s32.totalorder %s828, %s826
                %s833 = sphi 0, %s870
                %s834 = sphi %s806, %s873
                %s835 = sphi %s817, %s874
              $region63: #{tpu_custom_call.1} parent=59 // loop_header_branch
                %832 = sbr.rel (%p829) target = $region67
              $region64: #{tpu_custom_call.1} parent=59 // loop_body
                %v836 = vld [vmem:[%s834] sm:$0xff]
                %837 = vst [vmem:[%s835] sm:$0xff] %v836
                %v838 = vld [vmem:[%s834 + $0x8] sm:$0xff]
                %839 = vst [vmem:[%s835 + $0x8] sm:$0xff] %v838
                %v840 = vld [vmem:[%s834 + $0x10] sm:$0xff]
                %841 = vst [vmem:[%s835 + $0x10] sm:$0xff] %v840
                %v842 = vld [vmem:[%s834 + $0x18] sm:$0xff]
                %843 = vst [vmem:[%s835 + $0x18] sm:$0xff] %v842
                %v844 = vld [vmem:[%s834 + $0x20] sm:$0xff]
                %845 = vst [vmem:[%s835 + $0x20] sm:$0xff] %v844
                %v846 = vld [vmem:[%s834 + $0x28] sm:$0xff]
                %847 = vst [vmem:[%s835 + $0x28] sm:$0xff] %v846
                %v848 = vld [vmem:[%s834 + $0x30] sm:$0xff]
                %849 = vst [vmem:[%s835 + $0x30] sm:$0xff] %v848
                %v850 = vld [vmem:[%s834 + $0x38] sm:$0xff]
                %851 = vst [vmem:[%s835 + $0x38] sm:$0xff] %v850
                %v852 = vld [vmem:[%s834 + $0x40] sm:$0xff]
                %853 = vst [vmem:[%s835 + $0x40] sm:$0xff] %v852
                %v854 = vld [vmem:[%s834 + $0x48] sm:$0xff]
                %855 = vst [vmem:[%s835 + $0x48] sm:$0xff] %v854
                %v856 = vld [vmem:[%s834 + $0x50] sm:$0xff]
                %857 = vst [vmem:[%s835 + $0x50] sm:$0xff] %v856
                %v858 = vld [vmem:[%s834 + $0x58] sm:$0xff]
                %859 = vst [vmem:[%s835 + $0x58] sm:$0xff] %v858
                %v860 = vld [vmem:[%s834 + $0x60] sm:$0xff]
                %861 = vst [vmem:[%s835 + $0x60] sm:$0xff] %v860
                %v862 = vld [vmem:[%s834 + $0x68] sm:$0xff]
                %863 = vst [vmem:[%s835 + $0x68] sm:$0xff] %v862
                %v864 = vld [vmem:[%s834 + $0x70] sm:$0xff]
                %865 = vst [vmem:[%s835 + $0x70] sm:$0xff] %v864
                %v866 = vld [vmem:[%s834 + $0x78] sm:$0xff]
                %867 = vst [vmem:[%s835 + $0x78] sm:$0xff] %v866
                %s868 = sadd.s32 1, %s833
                %p869 = scmp.ge.s32.totalorder %s868, %s826
                %s870 = scalar_select %p869, 0, %s868
                %s871 = smul.u32 %s870, 128
                %s872 = smul.u32 %s870, 128
                %s873 = scalar_lea.vmem %s806, %s871 [#allocation4]
                %s874 = scalar_lea.vmem %s817, %s872
              $region65: #{tpu_custom_call.1} parent=59 // loop_footer
                %s830 = sadd.s32 %s828, 1
              $region66: #{tpu_custom_call.1} parent=59 // loop_footer_branch
                %827 = sbr.rel target = $region62
              $region67: #{tpu_custom_call.1} parent=59 // loop_exit
                _
              %s875 = sshrl.u32 %s813, 4
              %s876 = sand.u32 %s813, 15
              %s877 = smul.u32 %s875, 16
              %s878 = smul.u32 8, %s877
              %s879 = scalar_lea.vmem %s806, %s878 [#allocation4]
              %s880 = smul.u32 8, %s877
              %s881 = scalar_lea.vmem %s817, %s880
              // While loop
              $region68: #{tpu_custom_call.1} parent=59 // loop_pre_header
                _
              $region69: #{tpu_custom_call.1} parent=59 // loop_header
                %s883 = sphi 0, %s885
                %p884 = scmp.ge.s32.totalorder %s883, %s876
                %s888 = sphi 0, %s895
                %s889 = sphi %s879, %s898
                %s890 = sphi %s881, %s899
              $region70: #{tpu_custom_call.1} parent=59 // loop_header_branch
                %887 = sbr.rel (%p884) target = $region74
              $region71: #{tpu_custom_call.1} parent=59 // loop_body
                %v891 = vld [vmem:[%s889] sm:$0xff]
                %892 = vst [vmem:[%s890] sm:$0xff] %v891
                %s893 = sadd.s32 1, %s888
                %p894 = scmp.ge.s32.totalorder %s893, %s876
                %s895 = scalar_select %p894, 0, %s893
                %s896 = smul.u32 %s895, 8
                %s897 = smul.u32 %s895, 8
                %s898 = scalar_lea.vmem %s879, %s896 [#allocation4]
                %s899 = scalar_lea.vmem %s881, %s897
              $region72: #{tpu_custom_call.1} parent=59 // loop_footer
                %s885 = sadd.s32 %s883, 1
              $region73: #{tpu_custom_call.1} parent=59 // loop_footer_branch
                %882 = sbr.rel target = $region69
              $region74: #{tpu_custom_call.1} parent=59 // loop_exit
                _
            $region60: #{tpu_custom_call.1} parent=51 // pred_fallthru
              _
          $region52: #{tpu_custom_call.1} parent=47 // pred_fallthru
            _
          %978 = vnop
        $region48: #{tpu_custom_call.1} parent=39 // pred_fallthru
          _
      $region40: #{tpu_custom_call.1} parent=5 // pred_fallthru
        _
      %p979 = scmp.le.s32.totalorder 2, %s14
      // Predicated region
      $region97: #{tpu_custom_call.1} parent=5 // pred_check
        %p980 = pneg %p979
      $region98: #{tpu_custom_call.1} parent=5 // pred_check_branch
        %982 = sbr.rel (%p980) target = $region100
      $region99: #{tpu_custom_call.1} parent=5 // pred_region
        %s983 = ssub.s32 %s14, 2
        // Predicated region
        $region101: #{tpu_custom_call.1} parent=99 // pred_check
          %p984 = pneg %p153
        $region102: #{tpu_custom_call.1} parent=99 // pred_check_branch
          %986 = sbr.rel (%p984) target = $region104
        $region103: #{tpu_custom_call.1} parent=99 // pred_region
          %s987 = sand.u32 %s138, 1
          %s988 = sand.u32 %s138, 1
          %s989 = smul.addr %s988, 128
          %s990 = scalar_lea.vmem [#allocation4], %s989
        $region104: #{tpu_custom_call.1} parent=99 // pred_fallthru
          _
      $region100: #{tpu_custom_call.1} parent=5 // pred_fallthru
        _
    $region6: #{tpu_custom_call.1} parent=1 // loop_footer
      %s18 = sadd.s32 1, %s14
    $region7: #{tpu_custom_call.1} parent=1 // loop_footer_branch
      %13 = sbr.rel target = $region3
    $region8: #{tpu_custom_call.1} parent=1 // loop_exit
      _
    %991 = vsyncpa [#allocation3], 1
    %s992 = scalar_lea.sflag [#allocation3], 1
    %993 = vsyncpa %s992, 1

</llo_original>
